<compile_context>
chip_gen: v5e
topology: v5e:2x2
jax: 0.10.0
libtpu: 0.0.40
codegen_flags: <defaults>
</compile_context>

<pallas_src>
import math
import functools

import jax
import jax.numpy as jnp
from jax.experimental import pallas as pl
from jax.experimental.pallas import tpu as pltpu

# Conservative cross-generation VMEM budget (v7x has only 64 MiB physical).
_VMEM_LIMIT = 48 * 1024 * 1024


def _round_up(x, m):
    return ((x + m - 1) // m) * m


# ---------------------------------------------------------------------------
# Kernel 1: fused QKV projection  qkv = x @ W_qkv + b_qkv  (one wide GEMM).
# ---------------------------------------------------------------------------
def _qkv_proj_kernel(x_ref, w_ref, b_ref, o_ref):
    acc = jnp.dot(x_ref[...], w_ref[...], preferred_element_type=jnp.float32)
    o_ref[...] = (acc + b_ref[...]).astype(o_ref.dtype)


# ---------------------------------------------------------------------------
# Kernel 2: attention (all heads) + output projection + residual + LayerNorm
# for one (batch, query-tile) grid step.  K/V blocks are resident across the
# query-tile axis (their block index only depends on the batch index).
# ---------------------------------------------------------------------------
def _attn_kernel(q_ref, k_ref, v_ref, xres_ref, wo_ref, bo_ref, gamma_ref,
                 beta_ref, o_ref, *, n_heads, head_dim, s_valid, s_pad, eps):
    q = q_ref[...]            # (H, TQ, hd)    bf16
    k = k_ref[...]            # (H, S_pad, hd) bf16
    v = v_ref[...]            # (H, S_pad, hd) bf16

    # Scores for all heads at once (batched over H, contract head_dim).
    scale = 1.0 / math.sqrt(head_dim)
    s = jnp.einsum("hqd,hkd->hqk", q, k,
                   preferred_element_type=jnp.float32) * scale   # (H, TQ, S_pad) f32

    if s_pad > s_valid:  # static branch: mask zero-padded key positions
        key_idx = jax.lax.broadcasted_iota(jnp.int32, s.shape, 2)
        s = jnp.where(key_idx >= s_valid, -1e30, s)

    # Softmax in f32.
    s = s - jnp.max(s, axis=-1, keepdims=True)
    p = jnp.exp(s)
    p = p * pl.reciprocal(jnp.sum(p, axis=-1, keepdims=True), approx=True)

    # P @ V for all heads (batched over H, contract keys).
    pv = jnp.einsum("hqk,hkd->hqd", p.astype(jnp.bfloat16), v,
                    preferred_element_type=jnp.float32)           # (H, TQ, hd)
    pv = pv.astype(jnp.bfloat16)

    # Output projection accumulated over heads + residual + out-proj bias
    # (concat(heads) @ Wo == sum_h head_h @ Wo_h).  Wo is VMEM-resident.
    acc = xres_ref[...] + bo_ref[...]                             # (TQ, D) f32
    for h in range(n_heads):                                      # static unroll
        acc = acc + jnp.dot(pv[h], wo_ref[h],
                            preferred_element_type=jnp.float32)

    # dropout -> identity (inference).  LayerNorm in f32.
    mu = jnp.mean(acc, axis=-1, keepdims=True)
    var = jnp.mean((acc - mu) * (acc - mu), axis=-1, keepdims=True)
    y = (acc - mu) * jax.lax.rsqrt(var + eps)
    o_ref[...] = (y * gamma_ref[...] + beta_ref[...]).astype(o_ref.dtype)


def multi_head_attention(x, params, *, n_heads):
    """x: (B, S, D) float32.  params: dict of projection / layernorm params."""
    B, S, D = x.shape
    hd = D // n_heads
    assert n_heads * hd == D

    # ---- padding / tiling ---------------------------------------------------
    S_pad = _round_up(S, 128) if S >= 128 else _round_up(S, 8)
    TQ = 256 if (S_pad >= 256 and S_pad % 256 == 0) else min(S_pad, 128)
    n_q = S_pad // TQ

    x_p = x if S_pad == S else jnp.pad(x, ((0, 0), (0, S_pad - S), (0, 0)))
    x_bf = x_p.astype(jnp.bfloat16).reshape(B * S_pad, D)   # cast to bf16 ONCE

    # ---- QKV projection: one (B*S, D) @ (D, 3D) GEMM ------------------------
    w_qkv = jnp.concatenate(
        [params["wq_t"], params["wk_t"], params["wv_t"]], axis=1
    ).astype(jnp.bfloat16)                                    # (D, 3D) bf16
    b_qkv = jnp.concatenate(
        [params["bq"], params["bk"], params["bv"]], axis=1)   # (1, 3D) f32

    rows = B * S_pad
    TM = next(t for t in (512, 256, 128, rows) if rows % t == 0)

    qkv = pl.pallas_call(
        _qkv_proj_kernel,
        out_shape=jax.ShapeDtypeStruct((rows, 3 * D), jnp.bfloat16),
        grid_spec=pltpu.PrefetchScalarGridSpec(
            num_scalar_prefetch=0,
            grid=(rows // TM,),
            in_specs=[
                pl.BlockSpec((TM, D), lambda i: (i, 0)),          # x rows
                pl.BlockSpec((D, 3 * D), lambda i: (0, 0)),       # W_qkv (resident)
                pl.BlockSpec((1, 3 * D), lambda i: (0, 0)),       # b_qkv
            ],
            out_specs=pl.BlockSpec((TM, 3 * D), lambda i: (i, 0)),
        ),
        compiler_params=pltpu.CompilerParams(
            dimension_semantics=("parallel",),
            vmem_limit_bytes=_VMEM_LIMIT),
        cost_estimate=pl.CostEstimate(
            flops=2 * rows * D * 3 * D,
            transcendentals=0,
            bytes_accessed=rows * D * 2 + D * 3 * D * 2 + rows * 3 * D * 2),
    )(x_bf, w_qkv, b_qkv)

    # Layout change to (B, H, S_pad, hd) per tensor: free-ish XLA reshapes.
    qkv = qkv.reshape(B, S_pad, 3, n_heads, hd)
    q = qkv[:, :, 0].transpose(0, 2, 1, 3)
    k = qkv[:, :, 1].transpose(0, 2, 1, 3)
    v = qkv[:, :, 2].transpose(0, 2, 1, 3)

    wo_h = params["wo_t"].reshape(n_heads, hd, D).astype(jnp.bfloat16)

    kernel = functools.partial(_attn_kernel, n_heads=n_heads, head_dim=hd,
                               s_valid=S, s_pad=S_pad, eps=1e-5)

    kv_spec = pl.BlockSpec((pl.Squeezed(), n_heads, S_pad, hd),
                           lambda b, qi: (b, 0, 0, 0))
    row_spec = pl.BlockSpec((1, D), lambda b, qi: (0, 0))

    flops2 = B * (4 * S_pad * S_pad * D + 2 * S_pad * D * D)
    bytes2 = (3 * B * S_pad * D * 2          # q/k/v bf16 (ideal, K/V resident per b)
              + 2 * B * S_pad * D * 4        # x residual in, out
              + n_heads * hd * D * 2 + 4 * D * 4)

    out = pl.pallas_call(
        kernel,
        out_shape=jax.ShapeDtypeStruct((B, S_pad, D), x.dtype),
        grid_spec=pltpu.PrefetchScalarGridSpec(
            num_scalar_prefetch=0,
            grid=(B, n_q),
            in_specs=[
                pl.BlockSpec((pl.Squeezed(), n_heads, TQ, hd),
                             lambda b, qi: (b, 0, qi, 0)),         # Q tile (all heads)
                kv_spec,                                           # K (resident per b)
                kv_spec,                                           # V (resident per b)
                pl.BlockSpec((pl.Squeezed(), TQ, D),
                             lambda b, qi: (b, qi, 0)),            # x tile (f32 residual)
                pl.BlockSpec((n_heads, hd, D),
                             lambda b, qi: (0, 0, 0)),             # Wo (resident)
                row_spec,                                          # bo
                row_spec,                                          # gamma
                row_spec,                                          # beta
            ],
            out_specs=pl.BlockSpec((pl.Squeezed(), TQ, D),
                                   lambda b, qi: (b, qi, 0)),
        ),
        compiler_params=pltpu.CompilerParams(
            dimension_semantics=("parallel", "parallel"),
            vmem_limit_bytes=_VMEM_LIMIT),
        cost_estimate=pl.CostEstimate(
            flops=flops2,
            transcendentals=B * n_heads * S_pad * S_pad,
            bytes_accessed=bytes2),
    )(q, k, v, x_p, wo_h, params["bo"], params["gamma"], params["beta"])

    return out if S_pad == S else out[:, :S]


def init_params(key, d_model):
    """Deterministic parameter init matching nn.MultiheadAttention shapes:
    in_proj_weight (3D, D) split into Wq/Wk/Wv, out_proj (D, D), LayerNorm (D,)."""
    ks = jax.random.split(key, 5)
    scale = 1.0 / math.sqrt(d_model)
    wq = jax.random.uniform(ks[0], (d_model, d_model), jnp.float32, -scale, scale)
    wk = jax.random.uniform(ks[1], (d_model, d_model), jnp.float32, -scale, scale)
    wv = jax.random.uniform(ks[2], (d_model, d_model), jnp.float32, -scale, scale)
    wo = jax.random.uniform(ks[3], (d_model, d_model), jnp.float32, -scale, scale)
    bqkv = jax.random.uniform(ks[4], (3, d_model), jnp.float32, -scale, scale)
    return {
        # stored transposed so the math is x @ W
        "wq_t": wq.T, "wk_t": wk.T, "wv_t": wv.T, "wo_t": wo.T,
        "bq": bqkv[0:1], "bk": bqkv[1:2], "bv": bqkv[2:3],
        "bo": jnp.zeros((1, d_model), jnp.float32),
        "gamma": jnp.ones((1, d_model), jnp.float32),
        "beta": jnp.zeros((1, d_model), jnp.float32),
    }


def _reference(x, params, *, n_heads):
    """Pure-JAX f32 reference with PyTorch MultiheadAttention semantics (eval)."""
    B, S, D = x.shape
    hd = D // n_heads
    q = x @ params["wq_t"] + params["bq"]
    k = x @ params["wk_t"] + params["bk"]
    v = x @ params["wv_t"] + params["bv"]
    q = q.reshape(B, S, n_heads, hd).transpose(0, 2, 1, 3)
    k = k.reshape(B, S, n_heads, hd).transpose(0, 2, 1, 3)
    v = v.reshape(B, S, n_heads, hd).transpose(0, 2, 1, 3)
    s = jnp.einsum("bhqd,bhkd->bhqk", q, k) / math.sqrt(hd)
    p = jax.nn.softmax(s, axis=-1)
    attn = jnp.einsum("bhqk,bhkd->bhqd", p, v)
    attn = attn.transpose(0, 2, 1, 3).reshape(B, S, D)
    out = attn @ params["wo_t"] + params["bo"]
    y = x + out
    mu = jnp.mean(y, axis=-1, keepdims=True)
    var = jnp.mean((y - mu) ** 2, axis=-1, keepdims=True)
    return (y - mu) / jnp.sqrt(var + 1e-5) * params["gamma"] + params["beta"]


if __name__ == "__main__":
    B, S, D, H = 2, 8, 32, 4
    key = jax.random.PRNGKey(0)
    kx, kp, kx2 = jax.random.split(key, 3)
    x = jax.random.normal(kx, (B, S, D), jnp.float32)
    params = init_params(kp, D)

    out = multi_head_attention(x, params, n_heads=H)
    jax.block_until_ready(out)
    assert out.shape == (B, S, D)

    ref = _reference(x, params, n_heads=H)
    err = float(jnp.max(jnp.abs(out - ref)))
    # bf16 matmuls + approx reciprocal vs f32 reference -> loose tolerance.
    assert err < 5e-2, f"max abs err vs reference: {err}"

    # Second check exercising the sequence-padding + key-mask path (S=12 -> 16).
    S2 = 12
    x2 = jax.random.normal(kx2, (B, S2, D), jnp.float32)
    out2 = multi_head_attention(x2, params, n_heads=H)
    jax.block_until_ready(out2)
    assert out2.shape == (B, S2, D)
    ref2 = _reference(x2, params, n_heads=H)
    err2 = float(jnp.max(jnp.abs(out2 - ref2)))
    assert err2 < 5e-2, f"max abs err vs reference (padded path): {err2}"

    print("KERNEL_OK")
</pallas_src>

<mosaic_0001>
module attributes {stable_mosaic.version = 11 : i64} {
  func.func @_qkv_proj_kernel(%arg0: i32, %arg1: memref<16x32xbf16, #tpu.memory_space<vmem>>, %arg2: memref<32x96xbf16, #tpu.memory_space<vmem>>, %arg3: memref<1x96xf32, #tpu.memory_space<vmem>>, %arg4: memref<16x96xbf16, #tpu.memory_space<vmem>>) attributes {dimension_semantics = [#tpu.dimension_semantics<parallel>], iteration_bounds = array<i64: 1>, scalar_prefetch = 0 : i64, scratch_operands = 0 : i64, tpu.core_type = #tpu.core_type<tc>, window_params = [{transform_indices = @transform_0, window_bounds = array<i64: 16, 32>}, {pipeline_mode = #tpu.pipeline_mode<synchronous>, transform_indices = @transform_1, window_bounds = array<i64: 32, 96>}, {pipeline_mode = #tpu.pipeline_mode<synchronous>, transform_indices = @transform_2, window_bounds = array<i64: 1, 96>}, {transform_indices = @transform_3, window_bounds = array<i64: 16, 96>}]} {
    %c0 = arith.constant 0 : index
    %c0_0 = arith.constant 0 : index
    %0 = vector.load %arg1[%c0, %c0_0] : memref<16x32xbf16, #tpu.memory_space<vmem>>, vector<16x32xbf16>
    %c0_1 = arith.constant 0 : index
    %c0_2 = arith.constant 0 : index
    %1 = vector.load %arg2[%c0_1, %c0_2] : memref<32x96xbf16, #tpu.memory_space<vmem>>, vector<32x96xbf16>
    %cst = arith.constant dense<0.000000e+00> : vector<16x96xf32>
    %2 = tpu.matmul %0, %1, %cst {dimension_numbers = #tpu.dot_dimension_numbers<[1], [0], [0], [1], [0, 0, 1, 1], [], []>} : vector<16x32xbf16>, vector<32x96xbf16>, vector<16x96xf32> -> vector<16x96xf32>
    %c0_3 = arith.constant 0 : index
    %c0_4 = arith.constant 0 : index
    %3 = vector.load %arg3[%c0_3, %c0_4] : memref<1x96xf32, #tpu.memory_space<vmem>>, vector<1x96xf32>
    %4 = vector.broadcast %3 : vector<1x96xf32> to vector<16x96xf32>
    %5 = arith.addf %2, %4 : vector<16x96xf32>
    %6 = arith.truncf %5 : vector<16x96xf32> to vector<16x96xbf16>
    %c0_5 = arith.constant 0 : index
    %c0_6 = arith.constant 0 : index
    %7 = vector.load %arg4[%c0_5, %c0_6] : memref<16x96xbf16, #tpu.memory_space<vmem>>, vector<16x96xbf16>
    tpu.vector_store %arg4[%c0_5, %c0_6], %6 {strides = array<i32>} : memref<16x96xbf16, #tpu.memory_space<vmem>>, vector<16x96xbf16>,
    return
  }
  func.func @transform_0(%arg0: i32) -> (i32, i32) {
    %c0_i32 = arith.constant 0 : i32
    %c0_i32_0 = arith.constant 0 : i32
    return %arg0, %c0_i32 : i32, i32
  }
  func.func @transform_1(%arg0: i32) -> (i32, i32) {
    %c0_i32 = arith.constant 0 : i32
    %c0_i32_0 = arith.constant 0 : i32
    %c0_i32_1 = arith.constant 0 : i32
    return %c0_i32, %c0_i32_0 : i32, i32
  }
  func.func @transform_2(%arg0: i32) -> (i32, i32) {
    %c0_i32 = arith.constant 0 : i32
    %c0_i32_0 = arith.constant 0 : i32
    %c0_i32_1 = arith.constant 0 : i32
    return %c0_i32, %c0_i32_0 : i32, i32
  }
  func.func @transform_3(%arg0: i32) -> (i32, i32) {
    %c0_i32 = arith.constant 0 : i32
    %c0_i32_0 = arith.constant 0 : i32
    return %arg0, %c0_i32 : i32, i32
  }
}

</mosaic_0001>

<llo_original>
// kernel: tpu_custom_call.1
$region0: #{tpu_custom_call.1}
  #allocation0 [shape = 'u32[]', space=smem, size = 0x4, offset = 0x4, fixed_abs, tag = 'smem constant byte address 0x4 - core index']
  #allocation1 [shape = 'u32[72,128]{1,0:T(1,128)}', space=vmem, size = 0x9000, scoped, tag = 'internal scratch']
  %s0 = inlined_call_operand.hbm [shape: bf16[16,32], index: 0, kind: input, shape index: {}]
  %s1 = inlined_call_operand.hbm [shape: bf16[32,96], index: 1, kind: input, shape index: {}]
  %s2 = inlined_call_operand.vmem [shape: f32[1,96], index: 2, kind: input, shape index: {}]
  %s3 = inlined_call_operand.hbm [shape: bf16[16,96], index: 3, kind: output, shape index: {}]
  %s4 = sld [smem:[#allocation0]]
  $region30: #{tpu_custom_call.1} parent=0
    _
  %s6 = ssub.s32 1, %s4
  %s7 = scalar_select 0, %s6, %s4
  $region1: #{tpu_custom_call.1} parent=0
    #allocation2 [shape = 'u8[4096]{0}', space=vmem, size = 0x1000, scoped, tag = 'input window, operand 0, single buffered']
    #allocation3 [shape = 's32[1]{0}', space=sflag, size = 0x4, scoped, tag = 'scoped memory for tpu_custom_call.1']
    #allocation4 [shape = 's32[1]{0}', space=sflag, size = 0x4, scoped, tag = 'scoped memory for tpu_custom_call.1']
    #allocation5 [shape = 'u8[8192]{0}', space=vmem, size = 0x2000, scoped, tag = 'input window, operand 1, single buffered']
    #allocation6 [shape = 's32[1]{0}', space=sflag, size = 0x4, scoped, tag = 'scoped memory for tpu_custom_call.1']
    #allocation7 [shape = 'u8[4096]{0}', space=vmem, size = 0x1000, scoped, tag = 'output window, operand 0, single buffered']
    %8 = vsyncpa [#allocation3], 0
    %9 = vsyncpa [#allocation6], 0
    %10 = vsyncpa [#allocation4], 0
    // Predicated region
    $region2: #{tpu_custom_call.1} parent=1 // pred_check
      _
    $region3: #{tpu_custom_call.1} parent=1 // pred_check_branch
      %12 = sbr.rel (0) target = $region5
    $region4: #{tpu_custom_call.1} parent=1 // pred_region
      %14 = vsyncadd [#allocation3], 0
      %s15 = sshll.u32 %s0, 4
      %s16 = int_to_ptr.hbm [resolvable:$true] %s15
      %s17 = sshll.u32 [#allocation2], 4
      %s18 = int_to_ptr.vmem [resolvable:$true] %s17
      %23 = dma.hbm_to_vmem [thread:$0]  %s16, 128, %s18, [#allocation3], 64, 64, 4
    $region5: #{tpu_custom_call.1} parent=1 // pred_fallthru
      _
    // Predicated region
    $region6: #{tpu_custom_call.1} parent=1 // pred_check
      _
    $region7: #{tpu_custom_call.1} parent=1 // pred_check_branch
      %25 = sbr.rel (0) target = $region9
    $region8: #{tpu_custom_call.1} parent=1 // pred_region
      %27 = vsyncadd [#allocation6], 0
      %s28 = sshll.u32 %s1, 4
      %s29 = int_to_ptr.hbm [resolvable:$true] %s28
      %s30 = sshll.u32 [#allocation5], 4
      %s31 = int_to_ptr.vmem [resolvable:$true] %s30
      %36 = dma.hbm_to_vmem [thread:$0]  %s29, 256, %s31, [#allocation6], 64, 64, 4
    $region9: #{tpu_custom_call.1} parent=1 // pred_fallthru
      _
    // Predicated region
    $region10: #{tpu_custom_call.1} parent=1 // pred_check
      _
    $region11: #{tpu_custom_call.1} parent=1 // pred_check_branch
      %38 = sbr.rel (0) target = $region13
    $region12: #{tpu_custom_call.1} parent=1 // pred_region
      _
    $region13: #{tpu_custom_call.1} parent=1 // pred_fallthru
      _
    // Predicated region
    $region14: #{tpu_custom_call.1} parent=1 // pred_check
      _
    $region15: #{tpu_custom_call.1} parent=1 // pred_check_branch
      %40 = sbr.rel (0) target = $region17
    $region16: #{tpu_custom_call.1} parent=1 // pred_region
      %42 = dma.done [#allocation3], 128
    $region17: #{tpu_custom_call.1} parent=1 // pred_fallthru
      _
    // Predicated region
    $region18: #{tpu_custom_call.1} parent=1 // pred_check
      _
    $region19: #{tpu_custom_call.1} parent=1 // pred_check_branch
      %44 = sbr.rel (0) target = $region21
    $region20: #{tpu_custom_call.1} parent=1 // pred_region
      %46 = dma.done [#allocation6], 256
    $region21: #{tpu_custom_call.1} parent=1 // pred_fallthru
      _
    %v48 = vld [vmem:[#allocation2] sm:$0xf]
    %v49 = vld [vmem:[#allocation2 + $0x4] sm:$0xf]
    %v50 = vld [vmem:[#allocation5] sm:$0xf]
    %v51 = vld [vmem:[#allocation5 + $0x4] sm:$0xf]
    %v52 = vld [vmem:[#allocation5 + $0x8] sm:$0xf]
    %v53 = vld [vmem:[#allocation5 + $0xc] sm:$0xf]
    %v54 = vld [vmem:[%s2] sm:$0x1]
    %v56 = vperm.slane %v54, 0
    %v60 = vunpack.c.l.b16 %v48
    %v61 = vunpack.c.l.b16 %v49
    %v62 = vpack.c.b16 %v61, %v60
    %v67 = vunpack.c.l.b16 %v50
    %v68 = vunpack.c.l.b16 %v51
    %v69 = vunpack.c.l.b16 %v52
    %v70 = vunpack.c.l.b16 %v53
    %v71 = vpack.c.b16 %v68, %v67
    %v72 = vpack.c.b16 %v70, %v69
    %vm75 = vcmask 261120
    %v77 = vsel %vm75, %v62, 0
    %79 = vmatpush.bf16.msra.mxu0 0
    %80 = vmatpush.bf16.msra.mxu0 0
    %81 = vmatpush.bf16.msra.mxu0 0
    %82 = vmatpush.bf16.msra.mxu0 0
    %83 = vmatpush.bf16.msra.mxu0 0
    %84 = vmatpush.bf16.msra.mxu0 0
    %85 = vmatpush.bf16.msra.mxu0 %v72
    %86 = vmatpush.bf16.msra.mxu0 %v71
    %87 = vmatmul.bf16.gmra.mxu0 %v77
    %v88 = vpop.f32.mrf.mxu0
    %v89 = vadd.f32 %v56, %v88
    %v90 = vpop.f32.mrf.mxu0
    %v91 = vadd.f32 %v56, %v90
    %92 = vdwg.mxu0
    %v93 = vpack.c.bf16 %v89, %v89
    %v94 = vpack.c.bf16 %v91, %v91
    %vm95 = vcmask 781312
    %96 = vst.msk [vmem:[#allocation7] sm:$0xf] %vm95, %v93
    %97 = vst.msk [vmem:[#allocation7 + $0x4] sm:$0xf] %vm95, %v94
    // Predicated region
    $region22: #{tpu_custom_call.1} parent=1 // pred_check
      _
    $region23: #{tpu_custom_call.1} parent=1 // pred_check_branch
      %99 = sbr.rel (0) target = $region25
    $region24: #{tpu_custom_call.1} parent=1 // pred_region
      %101 = vsyncadd [#allocation4], 0
      %s102 = sshll.u32 [#allocation7], 4
      %s103 = int_to_ptr.vmem [resolvable:$true] %s102
      %s104 = sshll.u32 %s3, 4
      %s105 = int_to_ptr.hbm [resolvable:$true] %s104
      %110 = dma.vmem_to_hbm [thread:$0]  %s103, 128, %s105, [#allocation4], 64, 64, 4
    $region25: #{tpu_custom_call.1} parent=1 // pred_fallthru
      _
    // Predicated region
    $region26: #{tpu_custom_call.1} parent=1 // pred_check
      _
    $region27: #{tpu_custom_call.1} parent=1 // pred_check_branch
      %112 = sbr.rel (0) target = $region29
    $region28: #{tpu_custom_call.1} parent=1 // pred_region
      %114 = dma.done [#allocation4], 128
    $region29: #{tpu_custom_call.1} parent=1 // pred_fallthru
      _
    %115 = vsyncpa [#allocation3], 1
    %116 = vsyncpa [#allocation6], 1
    %117 = vsyncpa [#allocation4], 1

</llo_original>
